<compile_context>
chip_gen: v5e
topology: v5e:2x2
jax: 0.10.0
libtpu: 0.0.40
codegen_flags: <defaults>
</compile_context>

<pallas_src>
import jax
import jax.numpy as jnp
from jax.experimental import pallas as pl
from jax.experimental.pallas import tpu as pltpu


def _round_up(x, m):
    return (x + m - 1) // m * m


def _cdiv(a, b):
    return (a + b - 1) // b


def policy_kernel(img_ref, goal_ref,
                  w1d_ref, w1b_ref, b1_ref,
                  w2_ref, b2_ref,
                  w3_ref, b3_ref,
                  out_ref):
    wdt = w1d_ref.dtype  # MXU input dtype (bf16)

    img = img_ref[...].astype(wdt)    # no-op cast if inputs already bf16
    goal = goal_ref[...].astype(wdt)

    # Layer 1 (diff_goal + lane-concat folded into the matmul):
    #   [img, goal - img] @ W1 == img @ (W1_top - W1_bot) + goal @ W1_bot
    h = (jnp.dot(img, w1d_ref[...], preferred_element_type=jnp.float32)
         + jnp.dot(goal, w1b_ref[...], preferred_element_type=jnp.float32)
         + b1_ref[...])
    h = jnp.maximum(h, 0.0)                                    # f32 epilogue (v5e safe)

    # Layer 2: Linear + ReLU
    h = jnp.dot(h.astype(wdt), w2_ref[...],
                preferred_element_type=jnp.float32) + b2_ref[...]
    h = jnp.maximum(h, 0.0)

    # Output layer: Linear + Tanh, stored as a lane-dense 128-wide slab
    # (padded lanes have zero weights/bias -> tanh(0) == 0).
    o = jnp.dot(h.astype(wdt), w3_ref[...],
                preferred_element_type=jnp.float32) + b3_ref[...]
    out_ref[...] = jnp.tanh(o).astype(out_ref.dtype)


def deterministic_policy_forward(img_emb, goal_img_emb, params, *,
                                 tile_b=4096,
                                 weight_dtype=jnp.bfloat16,
                                 out_dtype=jnp.bfloat16,
                                 vmem_budget_bytes=24 * 1024 * 1024):
    (w1, b1), (w2, b2), (w3, b3) = params
    batch, enc = img_emb.shape
    hidden = w1.shape[1]
    act_dim = w3.shape[1]

    # --- weight preprocessing (tiny tensors, once per call) -------------------
    w1_top, w1_bot = w1[:enc], w1[enc:]
    w1d = (w1_top - w1_bot).astype(weight_dtype)
    w1b = w1_bot.astype(weight_dtype)
    w2c = w2.astype(weight_dtype)

    # Lane-dense output: pad the output projection to a 128-lane multiple.
    out_pad = _round_up(max(act_dim, 128), 128)
    w3p = jnp.zeros((hidden, out_pad), w3.dtype).at[:, :act_dim].set(w3)
    w3p = w3p.astype(weight_dtype)
    b3p = jnp.zeros((1, out_pad), jnp.float32).at[:, :act_dim].set(
        jnp.asarray(b3, jnp.float32).reshape(1, act_dim))
    b1f = jnp.asarray(b1, jnp.float32).reshape(1, hidden)
    b2f = jnp.asarray(b2, jnp.float32).reshape(1, hidden)

    # --- batch tiling: no jnp.pad; ragged last tile handled by Pallas masking --
    tb = min(tile_b, _round_up(batch, 8))
    if batch >= 16:
        # grid >= 2 so both v7x TensorCores get work under "parallel".
        tb = min(tb, _round_up(_cdiv(batch, 2), 8))
    # Balance tiles so padding waste is at most 7 rows (in the last tile only).
    tb = _round_up(_cdiv(batch, max(_cdiv(batch, tb), 1)), 8)

    in_itemsize = jnp.dtype(img_emb.dtype).itemsize
    out_itemsize = jnp.dtype(out_dtype).itemsize
    weight_bytes = ((2 * enc * hidden + hidden * hidden + hidden * out_pad)
                    * jnp.dtype(weight_dtype).itemsize
                    + (2 * hidden + out_pad) * 4)

    def vmem_footprint(t):
        return (2 * 2 * t * enc * in_itemsize          # 2 inputs, double-buffered
                + 2 * t * out_pad * out_itemsize       # output, double-buffered
                + weight_bytes)                        # resident weights/biases

    while tb > 8 and vmem_footprint(tb) > vmem_budget_bytes:
        tb = _round_up(tb // 2, 8)

    grid = (_cdiv(batch, tb),)

    act_spec = lambda shape: pl.BlockSpec(shape, lambda i: (i, 0))

    flops = 2 * batch * (2 * enc * hidden + hidden * hidden + hidden * out_pad)
    bytes_accessed = (2 * batch * enc * in_itemsize
                      + weight_bytes
                      + batch * out_pad * out_itemsize)

    def build(res_spec):
        return pl.pallas_call(
            policy_kernel,
            out_shape=jax.ShapeDtypeStruct((batch, out_pad), out_dtype),
            grid_spec=pltpu.PrefetchScalarGridSpec(
                num_scalar_prefetch=0,
                grid=grid,
                in_specs=[
                    act_spec((tb, enc)),          # img_emb
                    act_spec((tb, enc)),          # goal_img_emb
                    res_spec((enc, hidden)),      # W1_top - W1_bot
                    res_spec((enc, hidden)),      # W1_bot
                    res_spec((1, hidden)),        # b1
                    res_spec((hidden, hidden)),   # W2
                    res_spec((1, hidden)),        # b2
                    res_spec((hidden, out_pad)),  # W3 (lane-padded)
                    res_spec((1, out_pad)),       # b3 (lane-padded)
                ],
                out_specs=act_spec((tb, out_pad)),
            ),
            compiler_params=pltpu.CompilerParams(
                dimension_semantics=("parallel",),
                vmem_limit_bytes=32 * 1024 * 1024),
            cost_estimate=pl.CostEstimate(
                flops=flops,
                transcendentals=batch * out_pad,
                bytes_accessed=bytes_accessed),
        )(img_emb, goal_img_emb, w1d, w1b, b1f, w2c, b2f, w3p, b3p)

    try:
        # Constant-index_map weights only need a single VMEM copy (no double buffer).
        resident = lambda shape: pl.BlockSpec(shape, lambda i: (0, 0),
                                              pipeline_mode=pl.Buffered(1))
        out = build(resident)
    except Exception:
        # Fallback: default (double-buffered) resident weights if Buffered(1)
        # single-buffering is not supported by this jax build.
        out = build(lambda shape: pl.BlockSpec(shape, lambda i: (0, 0)))

    # Lane slice only (rows are exact — no batch padding); padded lanes are 0.
    return out[:, :act_dim]


def init_params(key, in_dim, hidden_dim, act_dim):
    """Deterministic synthetic init (mimics _init_weights: small weights, zero bias)."""
    k1, k2, k3 = jax.random.split(key, 3)
    scale = 0.1
    w1 = scale * jax.random.normal(k1, (in_dim, hidden_dim), jnp.float32)
    b1 = jnp.zeros((1, hidden_dim), jnp.float32)
    w2 = scale * jax.random.normal(k2, (hidden_dim, hidden_dim), jnp.float32)
    b2 = jnp.zeros((1, hidden_dim), jnp.float32)
    w3 = scale * jax.random.normal(k3, (hidden_dim, act_dim), jnp.float32)
    b3 = jnp.zeros((1, act_dim), jnp.float32)
    return ((w1, b1), (w2, b2), (w3, b3))


def ref_f32(img, goal, params):
    """Pure f32 reference matching the PyTorch module semantics exactly."""
    (w1, b1), (w2, b2), (w3, b3) = params
    goal = goal - img
    x = jnp.concatenate([img, goal], axis=1)
    h = jnp.maximum(x @ w1 + b1, 0.0)
    h = jnp.maximum(h @ w2 + b2, 0.0)
    return jnp.tanh(h @ w3 + b3)


def ref_matching(img, goal, params, weight_dtype=jnp.bfloat16):
    """Reference applying the same weight-split + bf16-matmul casts as the kernel."""
    (w1, b1), (w2, b2), (w3, b3) = params
    enc = img.shape[1]
    w1d = (w1[:enc] - w1[enc:]).astype(weight_dtype)
    w1b = w1[enc:].astype(weight_dtype)
    h = (jnp.dot(img.astype(weight_dtype), w1d, preferred_element_type=jnp.float32)
         + jnp.dot(goal.astype(weight_dtype), w1b, preferred_element_type=jnp.float32)
         + b1)
    h = jnp.maximum(h, 0.0)
    h = jnp.dot(h.astype(weight_dtype), w2.astype(weight_dtype),
                preferred_element_type=jnp.float32) + b2
    h = jnp.maximum(h, 0.0)
    o = jnp.dot(h.astype(weight_dtype), w3.astype(weight_dtype),
                preferred_element_type=jnp.float32) + b3
    return jnp.tanh(o)


if __name__ == "__main__":
    batch = 8
    encoder_dim = 32      # config['IQL']['encoder_dim']
    hidden_dim = 32       # config['IQL']['hidden_dim']
    n_hidden = 2          # config['IQL']['n_hidden']
    act_dim = 8
    in_dim = 2 * encoder_dim   # image_goal=True -> cat([img_emb, goal_img_emb])

    key = jax.random.PRNGKey(0)
    k_img, k_goal, k_params, k_big = jax.random.split(key, 4)

    img_emb = jax.random.normal(k_img, (batch, encoder_dim), jnp.float32)
    goal_img_emb = jax.random.normal(k_goal, (batch, encoder_dim), jnp.float32)
    params = init_params(k_params, in_dim, hidden_dim, act_dim)

    act = deterministic_policy_forward(img_emb, goal_img_emb, params)
    act = jax.block_until_ready(act)
    assert act.shape == (batch, act_dim)
    act_f32 = act.astype(jnp.float32)

    # Check vs a reference with identical bf16-matmul / weight-split casts
    # (output is stored in bf16 -> ~1 ulp = ~0.008 near |1| tolerance headroom).
    expected_match = ref_matching(img_emb, goal_img_emb, params)
    assert jnp.allclose(act_f32, expected_match, atol=2e-2, rtol=2e-2), (
        float(jnp.max(jnp.abs(act_f32 - expected_match))))

    # Semantic check vs the pure-f32 PyTorch-equivalent forward.
    expected_f32 = ref_f32(img_emb, goal_img_emb, params)
    assert jnp.allclose(act_f32, expected_f32, atol=5e-2, rtol=5e-2), (
        float(jnp.max(jnp.abs(act_f32 - expected_f32))))

    # Ragged batch with grid >= 2: exercises partial-block masking (no jnp.pad)
    # and the multi-tile "parallel" path used on v7x megacore.
    big_b = 520
    kb1, kb2 = jax.random.split(k_big)
    img_b = jax.random.normal(kb1, (big_b, encoder_dim), jnp.float32)
    goal_b = jax.random.normal(kb2, (big_b, encoder_dim), jnp.float32)
    act_b = jax.block_until_ready(
        deterministic_policy_forward(img_b, goal_b, params))
    assert act_b.shape == (big_b, act_dim)
    exp_b = ref_matching(img_b, goal_b, params)
    assert jnp.allclose(act_b.astype(jnp.float32), exp_b, atol=2e-2, rtol=2e-2), (
        float(jnp.max(jnp.abs(act_b.astype(jnp.float32) - exp_b))))

    # bf16-embeddings-end-to-end path (the cast below only synthesizes bf16
    # encoder outputs for the test; production should pass bf16 directly).
    act_bf = jax.block_until_ready(
        deterministic_policy_forward(img_emb.astype(jnp.bfloat16),
                                     goal_img_emb.astype(jnp.bfloat16), params))
    assert act_bf.shape == (batch, act_dim)
    assert float(jnp.max(jnp.abs(act_bf.astype(jnp.float32) - expected_f32))) < 1e-1

    print("KERNEL_OK")
</pallas_src>

<mosaic_0001>
module attributes {stable_mosaic.version = 11 : i64} {
  func.func @policy_kernel(%arg0: i32, %arg1: memref<8x32xf32, #tpu.memory_space<vmem>>, %arg2: memref<8x32xf32, #tpu.memory_space<vmem>>, %arg3: memref<32x32xbf16, #tpu.memory_space<vmem>>, %arg4: memref<32x32xbf16, #tpu.memory_space<vmem>>, %arg5: memref<1x32xf32, #tpu.memory_space<vmem>>, %arg6: memref<32x32xbf16, #tpu.memory_space<vmem>>, %arg7: memref<1x32xf32, #tpu.memory_space<vmem>>, %arg8: memref<32x128xbf16, #tpu.memory_space<vmem>>, %arg9: memref<1x128xf32, #tpu.memory_space<vmem>>, %arg10: memref<8x128xbf16, #tpu.memory_space<vmem>>) attributes {dimension_semantics = [#tpu.dimension_semantics<parallel>], iteration_bounds = array<i64: 1>, scalar_prefetch = 0 : i64, scratch_operands = 0 : i64, tpu.core_type = #tpu.core_type<tc>, window_params = [{transform_indices = @transform_0, window_bounds = array<i64: 8, 32>}, {transform_indices = @transform_1, window_bounds = array<i64: 8, 32>}, {pipeline_mode = #tpu.pipeline_mode<synchronous>, transform_indices = @transform_2, window_bounds = array<i64: 32, 32>}, {pipeline_mode = #tpu.pipeline_mode<synchronous>, transform_indices = @transform_3, window_bounds = array<i64: 32, 32>}, {pipeline_mode = #tpu.pipeline_mode<synchronous>, transform_indices = @transform_4, window_bounds = array<i64: 1, 32>}, {pipeline_mode = #tpu.pipeline_mode<synchronous>, transform_indices = @transform_5, window_bounds = array<i64: 32, 32>}, {pipeline_mode = #tpu.pipeline_mode<synchronous>, transform_indices = @transform_6, window_bounds = array<i64: 1, 32>}, {pipeline_mode = #tpu.pipeline_mode<synchronous>, transform_indices = @transform_7, window_bounds = array<i64: 32, 128>}, {pipeline_mode = #tpu.pipeline_mode<synchronous>, transform_indices = @transform_8, window_bounds = array<i64: 1, 128>}, {transform_indices = @transform_9, window_bounds = array<i64: 8, 128>}]} {
    %c0 = arith.constant 0 : index
    %c0_0 = arith.constant 0 : index
    %0 = vector.load %arg1[%c0, %c0_0] : memref<8x32xf32, #tpu.memory_space<vmem>>, vector<8x32xf32>
    %1 = arith.truncf %0 : vector<8x32xf32> to vector<8x32xbf16>
    %c0_1 = arith.constant 0 : index
    %c0_2 = arith.constant 0 : index
    %2 = vector.load %arg2[%c0_1, %c0_2] : memref<8x32xf32, #tpu.memory_space<vmem>>, vector<8x32xf32>
    %3 = arith.truncf %2 : vector<8x32xf32> to vector<8x32xbf16>
    %c0_3 = arith.constant 0 : index
    %c0_4 = arith.constant 0 : index
    %4 = vector.load %arg3[%c0_3, %c0_4] : memref<32x32xbf16, #tpu.memory_space<vmem>>, vector<32x32xbf16>
    %cst = arith.constant dense<0.000000e+00> : vector<8x32xf32>
    %5 = tpu.matmul %1, %4, %cst {dimension_numbers = #tpu.dot_dimension_numbers<[1], [0], [0], [1], [0, 0, 1, 1], [], []>} : vector<8x32xbf16>, vector<32x32xbf16>, vector<8x32xf32> -> vector<8x32xf32>
    %c0_5 = arith.constant 0 : index
    %c0_6 = arith.constant 0 : index
    %6 = vector.load %arg4[%c0_5, %c0_6] : memref<32x32xbf16, #tpu.memory_space<vmem>>, vector<32x32xbf16>
    %cst_7 = arith.constant dense<0.000000e+00> : vector<8x32xf32>
    %7 = tpu.matmul %3, %6, %cst_7 {dimension_numbers = #tpu.dot_dimension_numbers<[1], [0], [0], [1], [0, 0, 1, 1], [], []>} : vector<8x32xbf16>, vector<32x32xbf16>, vector<8x32xf32> -> vector<8x32xf32>
    %8 = arith.addf %5, %7 : vector<8x32xf32>
    %c0_8 = arith.constant 0 : index
    %c0_9 = arith.constant 0 : index
    %9 = vector.load %arg5[%c0_8, %c0_9] : memref<1x32xf32, #tpu.memory_space<vmem>>, vector<1x32xf32>
    %10 = vector.broadcast %9 : vector<1x32xf32> to vector<8x32xf32>
    %11 = arith.addf %8, %10 : vector<8x32xf32>
    %cst_10 = arith.constant 0.000000e+00 : f32
    %12 = vector.broadcast %cst_10 : f32 to vector<8x32xf32>
    %13 = arith.maximumf %11, %12 : vector<8x32xf32>
    %14 = arith.truncf %13 : vector<8x32xf32> to vector<8x32xbf16>
    %c0_11 = arith.constant 0 : index
    %c0_12 = arith.constant 0 : index
    %15 = vector.load %arg6[%c0_11, %c0_12] : memref<32x32xbf16, #tpu.memory_space<vmem>>, vector<32x32xbf16>
    %cst_13 = arith.constant dense<0.000000e+00> : vector<8x32xf32>
    %16 = tpu.matmul %14, %15, %cst_13 {dimension_numbers = #tpu.dot_dimension_numbers<[1], [0], [0], [1], [0, 0, 1, 1], [], []>} : vector<8x32xbf16>, vector<32x32xbf16>, vector<8x32xf32> -> vector<8x32xf32>
    %c0_14 = arith.constant 0 : index
    %c0_15 = arith.constant 0 : index
    %17 = vector.load %arg7[%c0_14, %c0_15] : memref<1x32xf32, #tpu.memory_space<vmem>>, vector<1x32xf32>
    %18 = vector.broadcast %17 : vector<1x32xf32> to vector<8x32xf32>
    %19 = arith.addf %16, %18 : vector<8x32xf32>
    %cst_16 = arith.constant 0.000000e+00 : f32
    %20 = vector.broadcast %cst_16 : f32 to vector<8x32xf32>
    %21 = arith.maximumf %19, %20 : vector<8x32xf32>
    %22 = arith.truncf %21 : vector<8x32xf32> to vector<8x32xbf16>
    %c0_17 = arith.constant 0 : index
    %c0_18 = arith.constant 0 : index
    %23 = vector.load %arg8[%c0_17, %c0_18] : memref<32x128xbf16, #tpu.memory_space<vmem>>, vector<32x128xbf16>
    %cst_19 = arith.constant dense<0.000000e+00> : vector<8x128xf32>
    %24 = tpu.matmul %22, %23, %cst_19 {dimension_numbers = #tpu.dot_dimension_numbers<[1], [0], [0], [1], [0, 0, 1, 1], [], []>} : vector<8x32xbf16>, vector<32x128xbf16>, vector<8x128xf32> -> vector<8x128xf32>
    %c0_20 = arith.constant 0 : index
    %c0_21 = arith.constant 0 : index
    %25 = vector.load %arg9[%c0_20, %c0_21] : memref<1x128xf32, #tpu.memory_space<vmem>>, vector<1x128xf32>
    %26 = vector.broadcast %25 : vector<1x128xf32> to vector<8x128xf32>
    %27 = arith.addf %24, %26 : vector<8x128xf32>
    %28 = math.tanh %27 : vector<8x128xf32>
    %29 = arith.truncf %28 : vector<8x128xf32> to vector<8x128xbf16>
    %c0_22 = arith.constant 0 : index
    %c0_23 = arith.constant 0 : index
    %30 = vector.load %arg10[%c0_22, %c0_23] : memref<8x128xbf16, #tpu.memory_space<vmem>>, vector<8x128xbf16>
    tpu.vector_store %arg10[%c0_22, %c0_23], %29 {strides = array<i32>} : memref<8x128xbf16, #tpu.memory_space<vmem>>, vector<8x128xbf16>,
    return
  }
  func.func @transform_0(%arg0: i32) -> (i32, i32) {
    %c0_i32 = arith.constant 0 : i32
    %c0_i32_0 = arith.constant 0 : i32
    return %arg0, %c0_i32 : i32, i32
  }
  func.func @transform_1(%arg0: i32) -> (i32, i32) {
    %c0_i32 = arith.constant 0 : i32
    %c0_i32_0 = arith.constant 0 : i32
    return %arg0, %c0_i32 : i32, i32
  }
  func.func @transform_2(%arg0: i32) -> (i32, i32) {
    %c0_i32 = arith.constant 0 : i32
    %c0_i32_0 = arith.constant 0 : i32
    %c0_i32_1 = arith.constant 0 : i32
    return %c0_i32, %c0_i32_0 : i32, i32
  }
  func.func @transform_3(%arg0: i32) -> (i32, i32) {
    %c0_i32 = arith.constant 0 : i32
    %c0_i32_0 = arith.constant 0 : i32
    %c0_i32_1 = arith.constant 0 : i32
    return %c0_i32, %c0_i32_0 : i32, i32
  }
  func.func @transform_4(%arg0: i32) -> (i32, i32) {
    %c0_i32 = arith.constant 0 : i32
    %c0_i32_0 = arith.constant 0 : i32
    %c0_i32_1 = arith.constant 0 : i32
    return %c0_i32, %c0_i32_0 : i32, i32
  }
  func.func @transform_5(%arg0: i32) -> (i32, i32) {
    %c0_i32 = arith.constant 0 : i32
    %c0_i32_0 = arith.constant 0 : i32
    %c0_i32_1 = arith.constant 0 : i32
    return %c0_i32, %c0_i32_0 : i32, i32
  }
  func.func @transform_6(%arg0: i32) -> (i32, i32) {
    %c0_i32 = arith.constant 0 : i32
    %c0_i32_0 = arith.constant 0 : i32
    %c0_i32_1 = arith.constant 0 : i32
    return %c0_i32, %c0_i32_0 : i32, i32
  }
  func.func @transform_7(%arg0: i32) -> (i32, i32) {
    %c0_i32 = arith.constant 0 : i32
    %c0_i32_0 = arith.constant 0 : i32
    %c0_i32_1 = arith.constant 0 : i32
    return %c0_i32, %c0_i32_0 : i32, i32
  }
  func.func @transform_8(%arg0: i32) -> (i32, i32) {
    %c0_i32 = arith.constant 0 : i32
    %c0_i32_0 = arith.constant 0 : i32
    %c0_i32_1 = arith.constant 0 : i32
    return %c0_i32, %c0_i32_0 : i32, i32
  }
  func.func @transform_9(%arg0: i32) -> (i32, i32) {
    %c0_i32 = arith.constant 0 : i32
    %c0_i32_0 = arith.constant 0 : i32
    return %arg0, %c0_i32 : i32, i32
  }
}

module attributes {stable_mosaic.version = 11 : i64} {
  func.func @policy_kernel(%arg0: i32, %arg1: memref<8x32xf32, #tpu.memory_space<vmem>>, %arg2: memref<8x32xf32, #tpu.memory_space<vmem>>, %arg3: memref<32x32xbf16, #tpu.memory_space<vmem>>, %arg4: memref<32x32xbf16, #tpu.memory_space<vmem>>, %arg5: memref<1x32xf32, #tpu.memory_space<vmem>>, %arg6: memref<32x32xbf16, #tpu.memory_space<vmem>>, %arg7: memref<1x32xf32, #tpu.memory_space<vmem>>, %arg8: memref<32x128xbf16, #tpu.memory_space<vmem>>, %arg9: memref<1x128xf32, #tpu.memory_space<vmem>>, %arg10: memref<8x128xbf16, #tpu.memory_space<vmem>>) attributes {dimension_semantics = [#tpu.dimension_semantics<parallel>], iteration_bounds = array<i64: 1>, scalar_prefetch = 0 : i64, scratch_operands = 0 : i64, tpu.core_type = #tpu.core_type<tc>, window_params = [{transform_indices = @transform_0, window_bounds = array<i64: 8, 32>}, {transform_indices = @transform_1, window_bounds = array<i64: 8, 32>}, {pipeline_mode = #tpu.pipeline_mode<synchronous>, transform_indices = @transform_2, window_bounds = array<i64: 32, 32>}, {pipeline_mode = #tpu.pipeline_mode<synchronous>, transform_indices = @transform_3, window_bounds = array<i64: 32, 32>}, {pipeline_mode = #tpu.pipeline_mode<synchronous>, transform_indices = @transform_4, window_bounds = array<i64: 1, 32>}, {pipeline_mode = #tpu.pipeline_mode<synchronous>, transform_indices = @transform_5, window_bounds = array<i64: 32, 32>}, {pipeline_mode = #tpu.pipeline_mode<synchronous>, transform_indices = @transform_6, window_bounds = array<i64: 1, 32>}, {pipeline_mode = #tpu.pipeline_mode<synchronous>, transform_indices = @transform_7, window_bounds = array<i64: 32, 128>}, {pipeline_mode = #tpu.pipeline_mode<synchronous>, transform_indices = @transform_8, window_bounds = array<i64: 1, 128>}, {transform_indices = @transform_9, window_bounds = array<i64: 8, 128>}]} {
    %c0 = arith.constant 0 : index
    %c0_0 = arith.constant 0 : index
    %0 = vector.load %arg1[%c0, %c0_0] : memref<8x32xf32, #tpu.memory_space<vmem>>, vector<8x32xf32>
    %1 = arith.truncf %0 : vector<8x32xf32> to vector<8x32xbf16>
    %c0_1 = arith.constant 0 : index
    %c0_2 = arith.constant 0 : index
    %2 = vector.load %arg2[%c0_1, %c0_2] : memref<8x32xf32, #tpu.memory_space<vmem>>, vector<8x32xf32>
    %3 = arith.truncf %2 : vector<8x32xf32> to vector<8x32xbf16>
    %c0_3 = arith.constant 0 : index
    %c0_4 = arith.constant 0 : index
    %4 = vector.load %arg3[%c0_3, %c0_4] : memref<32x32xbf16, #tpu.memory_space<vmem>>, vector<32x32xbf16>
    %cst = arith.constant dense<0.000000e+00> : vector<8x32xf32>
    %5 = tpu.matmul %1, %4, %cst {dimension_numbers = #tpu.dot_dimension_numbers<[1], [0], [0], [1], [0, 0, 1, 1], [], []>} : vector<8x32xbf16>, vector<32x32xbf16>, vector<8x32xf32> -> vector<8x32xf32>
    %c0_5 = arith.constant 0 : index
    %c0_6 = arith.constant 0 : index
    %6 = vector.load %arg4[%c0_5, %c0_6] : memref<32x32xbf16, #tpu.memory_space<vmem>>, vector<32x32xbf16>
    %cst_7 = arith.constant dense<0.000000e+00> : vector<8x32xf32>
    %7 = tpu.matmul %3, %6, %cst_7 {dimension_numbers = #tpu.dot_dimension_numbers<[1], [0], [0], [1], [0, 0, 1, 1], [], []>} : vector<8x32xbf16>, vector<32x32xbf16>, vector<8x32xf32> -> vector<8x32xf32>
    %8 = arith.addf %5, %7 : vector<8x32xf32>
    %c0_8 = arith.constant 0 : index
    %c0_9 = arith.constant 0 : index
    %9 = vector.load %arg5[%c0_8, %c0_9] : memref<1x32xf32, #tpu.memory_space<vmem>>, vector<1x32xf32>
    %10 = vector.broadcast %9 : vector<1x32xf32> to vector<8x32xf32>
    %11 = arith.addf %8, %10 : vector<8x32xf32>
    %cst_10 = arith.constant 0.000000e+00 : f32
    %12 = vector.broadcast %cst_10 : f32 to vector<8x32xf32>
    %13 = arith.maximumf %11, %12 : vector<8x32xf32>
    %14 = arith.truncf %13 : vector<8x32xf32> to vector<8x32xbf16>
    %c0_11 = arith.constant 0 : index
    %c0_12 = arith.constant 0 : index
    %15 = vector.load %arg6[%c0_11, %c0_12] : memref<32x32xbf16, #tpu.memory_space<vmem>>, vector<32x32xbf16>
    %cst_13 = arith.constant dense<0.000000e+00> : vector<8x32xf32>
    %16 = tpu.matmul %14, %15, %cst_13 {dimension_numbers = #tpu.dot_dimension_numbers<[1], [0], [0], [1], [0, 0, 1, 1], [], []>} : vector<8x32xbf16>, vector<32x32xbf16>, vector<8x32xf32> -> vector<8x32xf32>
    %c0_14 = arith.constant 0 : index
    %c0_15 = arith.constant 0 : index
    %17 = vector.load %arg7[%c0_14, %c0_15] : memref<1x32xf32, #tpu.memory_space<vmem>>, vector<1x32xf32>
    %18 = vector.broadcast %17 : vector<1x32xf32> to vector<8x32xf32>
    %19 = arith.addf %16, %18 : vector<8x32xf32>
    %cst_16 = arith.constant 0.000000e+00 : f32
    %20 = vector.broadcast %cst_16 : f32 to vector<8x32xf32>
    %21 = arith.maximumf %19, %20 : vector<8x32xf32>
    %22 = arith.truncf %21 : vector<8x32xf32> to vector<8x32xbf16>
    %c0_17 = arith.constant 0 : index
    %c0_18 = arith.constant 0 : index
    %23 = vector.load %arg8[%c0_17, %c0_18] : memref<32x128xbf16, #tpu.memory_space<vmem>>, vector<32x128xbf16>
    %cst_19 = arith.constant dense<0.000000e+00> : vector<8x128xf32>
    %24 = tpu.matmul %22, %23, %cst_19 {dimension_numbers = #tpu.dot_dimension_numbers<[1], [0], [0], [1], [0, 0, 1, 1], [], []>} : vector<8x32xbf16>, vector<32x128xbf16>, vector<8x128xf32> -> vector<8x128xf32>
    %c0_20 = arith.constant 0 : index
    %c0_21 = arith.constant 0 : index
    %25 = vector.load %arg9[%c0_20, %c0_21] : memref<1x128xf32, #tpu.memory_space<vmem>>, vector<1x128xf32>
    %26 = vector.broadcast %25 : vector<1x128xf32> to vector<8x128xf32>
    %27 = arith.addf %24, %26 : vector<8x128xf32>
    %28 = math.tanh %27 : vector<8x128xf32>
    %29 = arith.truncf %28 : vector<8x128xf32> to vector<8x128xbf16>
    %c0_22 = arith.constant 0 : index
    %c0_23 = arith.constant 0 : index
    %30 = vector.load %arg10[%c0_22, %c0_23] : memref<8x128xbf16, #tpu.memory_space<vmem>>, vector<8x128xbf16>
    tpu.vector_store %arg10[%c0_22, %c0_23], %29 {strides = array<i32>} : memref<8x128xbf16, #tpu.memory_space<vmem>>, vector<8x128xbf16>,
    return
  }
  func.func @transform_0(%arg0: i32) -> (i32, i32) {
    %c0_i32 = arith.constant 0 : i32
    %c0_i32_0 = arith.constant 0 : i32
    return %arg0, %c0_i32 : i32, i32
  }
  func.func @transform_1(%arg0: i32) -> (i32, i32) {
    %c0_i32 = arith.constant 0 : i32
    %c0_i32_0 = arith.constant 0 : i32
    return %arg0, %c0_i32 : i32, i32
  }
  func.func @transform_2(%arg0: i32) -> (i32, i32) {
    %c0_i32 = arith.constant 0 : i32
    %c0_i32_0 = arith.constant 0 : i32
    %c0_i32_1 = arith.constant 0 : i32
    return %c0_i32, %c0_i32_0 : i32, i32
  }
  func.func @transform_3(%arg0: i32) -> (i32, i32) {
    %c0_i32 = arith.constant 0 : i32
    %c0_i32_0 = arith.constant 0 : i32
    %c0_i32_1 = arith.constant 0 : i32
    return %c0_i32, %c0_i32_0 : i32, i32
  }
  func.func @transform_4(%arg0: i32) -> (i32, i32) {
    %c0_i32 = arith.constant 0 : i32
    %c0_i32_0 = arith.constant 0 : i32
    %c0_i32_1 = arith.constant 0 : i32
    return %c0_i32, %c0_i32_0 : i32, i32
  }
  func.func @transform_5(%arg0: i32) -> (i32, i32) {
    %c0_i32 = arith.constant 0 : i32
    %c0_i32_0 = arith.constant 0 : i32
    %c0_i32_1 = arith.constant 0 : i32
    return %c0_i32, %c0_i32_0 : i32, i32
  }
  func.func @transform_6(%arg0: i32) -> (i32, i32) {
    %c0_i32 = arith.constant 0 : i32
    %c0_i32_0 = arith.constant 0 : i32
    %c0_i32_1 = arith.constant 0 : i32
    return %c0_i32, %c0_i32_0 : i32, i32
  }
  func.func @transform_7(%arg0: i32) -> (i32, i32) {
    %c0_i32 = arith.constant 0 : i32
    %c0_i32_0 = arith.constant 0 : i32
    %c0_i32_1 = arith.constant 0 : i32
    return %c0_i32, %c0_i32_0 : i32, i32
  }
  func.func @transform_8(%arg0: i32) -> (i32, i32) {
    %c0_i32 = arith.constant 0 : i32
    %c0_i32_0 = arith.constant 0 : i32
    %c0_i32_1 = arith.constant 0 : i32
    return %c0_i32, %c0_i32_0 : i32, i32
  }
  func.func @transform_9(%arg0: i32) -> (i32, i32) {
    %c0_i32 = arith.constant 0 : i32
    %c0_i32_0 = arith.constant 0 : i32
    return %arg0, %c0_i32 : i32, i32
  }
}

</mosaic_0001>

<llo_original>
// kernel: tpu_custom_call.1
$region0: #{tpu_custom_call.1}
  #allocation0 [shape = 'u32[]', space=smem, size = 0x4, offset = 0x4, fixed_abs, tag = 'smem constant byte address 0x4 - core index']
  #allocation1 [shape = 'u32[72,128]{1,0:T(1,128)}', space=vmem, size = 0x9000, scoped, tag = 'internal scratch']
  %s0 = inlined_call_operand.hbm [shape: f32[8,32], index: 0, kind: input, shape index: {}]
  %s1 = inlined_call_operand.hbm [shape: f32[8,32], index: 1, kind: input, shape index: {}]
  %s2 = inlined_call_operand.hbm [shape: bf16[32,32], index: 2, kind: input, shape index: {}]
  %s3 = inlined_call_operand.hbm [shape: bf16[32,32], index: 3, kind: input, shape index: {}]
  %s4 = inlined_call_operand.vmem [shape: f32[1,32], index: 4, kind: input, shape index: {}]
  %s5 = inlined_call_operand.hbm [shape: bf16[32,32], index: 5, kind: input, shape index: {}]
  %s6 = inlined_call_operand.vmem [shape: f32[1,32], index: 6, kind: input, shape index: {}]
  %s7 = inlined_call_operand.hbm [shape: bf16[32,128], index: 7, kind: input, shape index: {}]
  %s8 = inlined_call_operand.vmem [shape: f32[1,128], index: 8, kind: input, shape index: {}]
  %s9 = inlined_call_operand.hbm [shape: bf16[8,128], index: 9, kind: output, shape index: {}]
  %s10 = sld [smem:[#allocation0]]
  $region70: #{tpu_custom_call.1} parent=0
    _
  %s12 = ssub.s32 1, %s10
  %s13 = scalar_select 0, %s12, %s10
  $region1: #{tpu_custom_call.1} parent=0
    #allocation2 [shape = 'u8[4096]{0}', space=vmem, size = 0x1000, scoped, tag = 'input window, operand 0, single buffered']
    #allocation3 [shape = 's32[1]{0}', space=sflag, size = 0x4, scoped, tag = 'scoped memory for tpu_custom_call.1']
    #allocation4 [shape = 's32[1]{0}', space=sflag, size = 0x4, scoped, tag = 'scoped memory for tpu_custom_call.1']
    #allocation5 [shape = 'u8[4096]{0}', space=vmem, size = 0x1000, scoped, tag = 'input window, operand 1, single buffered']
    #allocation6 [shape = 's32[1]{0}', space=sflag, size = 0x4, scoped, tag = 'scoped memory for tpu_custom_call.1']
    #allocation7 [shape = 'u8[8192]{0}', space=vmem, size = 0x2000, scoped, tag = 'input window, operand 2, single buffered']
    #allocation8 [shape = 'u8[8192]{0}', space=vmem, size = 0x2000, scoped, tag = 'input window, operand 3, single buffered']
    #allocation9 [shape = 's32[1]{0}', space=sflag, size = 0x4, scoped, tag = 'scoped memory for tpu_custom_call.1']
    #allocation10 [shape = 'u8[8192]{0}', space=vmem, size = 0x2000, scoped, tag = 'input window, operand 5, single buffered']
    #allocation11 [shape = 'u8[8192]{0}', space=vmem, size = 0x2000, scoped, tag = 'input window, operand 7, single buffered']
    #allocation12 [shape = 's32[1]{0}', space=sflag, size = 0x4, scoped, tag = 'scoped memory for tpu_custom_call.1']
    #allocation13 [shape = 'u8[2048]{0}', space=vmem, size = 0x800, scoped, tag = 'output window, operand 0, single buffered']
    %14 = vsyncpa [#allocation3], 0
    %15 = vsyncpa [#allocation6], 0
    %16 = vsyncpa [#allocation9], 0
    %17 = vsyncpa [#allocation12], 0
    %18 = vsyncpa [#allocation4], 0
    // Predicated region
    $region2: #{tpu_custom_call.1} parent=1 // pred_check
      _
    $region3: #{tpu_custom_call.1} parent=1 // pred_check_branch
      %20 = sbr.rel (0) target = $region5
    $region4: #{tpu_custom_call.1} parent=1 // pred_region
      %22 = vsyncadd [#allocation3], 0
      %s24 = sshll.u32 %s0, 4
      %s25 = int_to_ptr.hbm [resolvable:$true] %s24
      %s26 = sshll.u32 [#allocation2], 4
      %s27 = int_to_ptr.vmem [resolvable:$true] %s26
      %29 = dma.hbm_to_vmem [thread:$0]  %s25, 128, %s27, [#allocation3]
    $region5: #{tpu_custom_call.1} parent=1 // pred_fallthru
      _
    // Predicated region
    $region6: #{tpu_custom_call.1} parent=1 // pred_check
      _
    $region7: #{tpu_custom_call.1} parent=1 // pred_check_branch
      %31 = sbr.rel (0) target = $region9
    $region8: #{tpu_custom_call.1} parent=1 // pred_region
      %33 = vsyncadd [#allocation6], 0
      %s35 = sshll.u32 %s1, 4
      %s36 = int_to_ptr.hbm [resolvable:$true] %s35
      %s37 = sshll.u32 [#allocation5], 4
      %s38 = int_to_ptr.vmem [resolvable:$true] %s37
      %40 = dma.hbm_to_vmem [thread:$0]  %s36, 128, %s38, [#allocation6]
    $region9: #{tpu_custom_call.1} parent=1 // pred_fallthru
      _
    // Predicated region
    $region10: #{tpu_custom_call.1} parent=1 // pred_check
      _
    $region11: #{tpu_custom_call.1} parent=1 // pred_check_branch
      %42 = sbr.rel (0) target = $region13
    $region12: #{tpu_custom_call.1} parent=1 // pred_region
      %44 = vsyncadd [#allocation6], 0
      %s45 = sshll.u32 %s2, 4
      %s46 = int_to_ptr.hbm [resolvable:$true] %s45
      %s47 = sshll.u32 [#allocation7], 4
      %s48 = int_to_ptr.vmem [resolvable:$true] %s47
      %53 = dma.hbm_to_vmem [thread:$0]  %s46, 256, %s48, [#allocation6], 64, 64, 4
    $region13: #{tpu_custom_call.1} parent=1 // pred_fallthru
      _
    // Predicated region
    $region14: #{tpu_custom_call.1} parent=1 // pred_check
      _
    $region15: #{tpu_custom_call.1} parent=1 // pred_check_branch
      %55 = sbr.rel (0) target = $region17
    $region16: #{tpu_custom_call.1} parent=1 // pred_region
      %57 = vsyncadd [#allocation9], 0
      %s58 = sshll.u32 %s3, 4
      %s59 = int_to_ptr.hbm [resolvable:$true] %s58
      %s60 = sshll.u32 [#allocation8], 4
      %s61 = int_to_ptr.vmem [resolvable:$true] %s60
      %66 = dma.hbm_to_vmem [thread:$0]  %s59, 256, %s61, [#allocation9], 64, 64, 4
    $region17: #{tpu_custom_call.1} parent=1 // pred_fallthru
      _
    // Predicated region
    $region18: #{tpu_custom_call.1} parent=1 // pred_check
      _
    $region19: #{tpu_custom_call.1} parent=1 // pred_check_branch
      %68 = sbr.rel (0) target = $region21
    $region20: #{tpu_custom_call.1} parent=1 // pred_region
      _
    $region21: #{tpu_custom_call.1} parent=1 // pred_fallthru
      _
    // Predicated region
    $region22: #{tpu_custom_call.1} parent=1 // pred_check
      _
    $region23: #{tpu_custom_call.1} parent=1 // pred_check_branch
      %70 = sbr.rel (0) target = $region25
    $region24: #{tpu_custom_call.1} parent=1 // pred_region
      %72 = vsyncadd [#allocation9], 0
      %s73 = sshll.u32 %s5, 4
      %s74 = int_to_ptr.hbm [resolvable:$true] %s73
      %s75 = sshll.u32 [#allocation10], 4
      %s76 = int_to_ptr.vmem [resolvable:$true] %s75
      %81 = dma.hbm_to_vmem [thread:$0]  %s74, 256, %s76, [#allocation9], 64, 64, 4
    $region25: #{tpu_custom_call.1} parent=1 // pred_fallthru
      _
    // Predicated region
    $region26: #{tpu_custom_call.1} parent=1 // pred_check
      _
    $region27: #{tpu_custom_call.1} parent=1 // pred_check_branch
      %83 = sbr.rel (0) target = $region29
    $region28: #{tpu_custom_call.1} parent=1 // pred_region
      _
    $region29: #{tpu_custom_call.1} parent=1 // pred_fallthru
      _
    // Predicated region
    $region30: #{tpu_custom_call.1} parent=1 // pred_check
      _
    $region31: #{tpu_custom_call.1} parent=1 // pred_check_branch
      %85 = sbr.rel (0) target = $region33
    $region32: #{tpu_custom_call.1} parent=1 // pred_region
      %87 = vsyncadd [#allocation12], 0
      %s88 = sshll.u32 %s7, 4
      %s89 = int_to_ptr.hbm [resolvable:$true] %s88
      %s90 = sshll.u32 [#allocation11], 4
      %s91 = int_to_ptr.vmem [resolvable:$true] %s90
      %96 = dma.hbm_to_vmem [thread:$0]  %s89, 256, %s91, [#allocation12], 64, 64, 4
    $region33: #{tpu_custom_call.1} parent=1 // pred_fallthru
      _
    // Predicated region
    $region34: #{tpu_custom_call.1} parent=1 // pred_check
      _
    $region35: #{tpu_custom_call.1} parent=1 // pred_check_branch
      %98 = sbr.rel (0) target = $region37
    $region36: #{tpu_custom_call.1} parent=1 // pred_region
      _
    $region37: #{tpu_custom_call.1} parent=1 // pred_fallthru
      _
    // Predicated region
    $region38: #{tpu_custom_call.1} parent=1 // pred_check
      _
    $region39: #{tpu_custom_call.1} parent=1 // pred_check_branch
      %100 = sbr.rel (0) target = $region41
    $region40: #{tpu_custom_call.1} parent=1 // pred_region
      %102 = dma.done [#allocation3], 128
    $region41: #{tpu_custom_call.1} parent=1 // pred_fallthru
      _
    // Predicated region
    $region42: #{tpu_custom_call.1} parent=1 // pred_check
      _
    $region43: #{tpu_custom_call.1} parent=1 // pred_check_branch
      %104 = sbr.rel (0) target = $region45
    $region44: #{tpu_custom_call.1} parent=1 // pred_region
      %106 = dma.done [#allocation6], 128
    $region45: #{tpu_custom_call.1} parent=1 // pred_fallthru
      _
    // Predicated region
    $region46: #{tpu_custom_call.1} parent=1 // pred_check
      _
    $region47: #{tpu_custom_call.1} parent=1 // pred_check_branch
      %108 = sbr.rel (0) target = $region49
    $region48: #{tpu_custom_call.1} parent=1 // pred_region
      %110 = dma.done [#allocation6], 256
    $region49: #{tpu_custom_call.1} parent=1 // pred_fallthru
      _
    // Predicated region
    $region50: #{tpu_custom_call.1} parent=1 // pred_check
      _
    $region51: #{tpu_custom_call.1} parent=1 // pred_check_branch
      %112 = sbr.rel (0) target = $region53
    $region52: #{tpu_custom_call.1} parent=1 // pred_region
      %114 = dma.done [#allocation9], 256
    $region53: #{tpu_custom_call.1} parent=1 // pred_fallthru
      _
    // Predicated region
    $region54: #{tpu_custom_call.1} parent=1 // pred_check
      _
    $region55: #{tpu_custom_call.1} parent=1 // pred_check_branch
      %116 = sbr.rel (0) target = $region57
    $region56: #{tpu_custom_call.1} parent=1 // pred_region
      %118 = dma.done [#allocation9], 256
    $region57: #{tpu_custom_call.1} parent=1 // pred_fallthru
      _
    // Predicated region
    $region58: #{tpu_custom_call.1} parent=1 // pred_check
      _
    $region59: #{tpu_custom_call.1} parent=1 // pred_check_branch
      %120 = sbr.rel (0) target = $region61
    $region60: #{tpu_custom_call.1} parent=1 // pred_region
      %122 = dma.done [#allocation12], 256
    $region61: #{tpu_custom_call.1} parent=1 // pred_fallthru
      _
    %v124 = vld [vmem:[#allocation2] sm:$0xff]
    %v125 = vpack.c.bf16 %v124, %v124
    %v126 = vld [vmem:[#allocation5] sm:$0xff]
    %v127 = vpack.c.bf16 %v126, %v126
    %v128 = vld [vmem:[#allocation7] sm:$0xf]
    %v129 = vld [vmem:[#allocation7 + $0x4] sm:$0xf]
    %v130 = vld [vmem:[#allocation7 + $0x8] sm:$0xf]
    %v131 = vld [vmem:[#allocation7 + $0xc] sm:$0xf]
    %v132 = vld [vmem:[#allocation8] sm:$0xf]
    %v133 = vld [vmem:[#allocation8 + $0x4] sm:$0xf]
    %v134 = vld [vmem:[#allocation8 + $0x8] sm:$0xf]
    %v135 = vld [vmem:[#allocation8 + $0xc] sm:$0xf]
    %v140 = vunpack.c.l.b16 %v132
    %v141 = vunpack.c.l.b16 %v133
    %v142 = vunpack.c.l.b16 %v134
    %v143 = vunpack.c.l.b16 %v135
    %v144 = vpack.c.b16 %v141, %v140
    %v145 = vpack.c.b16 %v143, %v142
    %vm148 = vcmask 261120
    %v150 = vsel %vm148, %v127, 0
    %152 = vmatpush.bf16.msra.mxu0 0
    %153 = vmatpush.bf16.msra.mxu0 0
    %154 = vmatpush.bf16.msra.mxu0 0
    %155 = vmatpush.bf16.msra.mxu0 0
    %156 = vmatpush.bf16.msra.mxu0 0
    %157 = vmatpush.bf16.msra.mxu0 0
    %158 = vmatpush.bf16.msra.mxu0 %v145
    %159 = vmatpush.bf16.msra.mxu0 %v144
    %160 = vmatmul.bf16.gmra.mxu0 %v150
    %v161 = vpop.f32.mrf.mxu0
    %v162 = vadd.f32 0.0, %v161
    %v163 = vpop.f32.mrf.mxu0
    %164 = vdwg.mxu0
    %v169 = vunpack.c.l.b16 %v128
    %v170 = vunpack.c.l.b16 %v129
    %v171 = vunpack.c.l.b16 %v130
    %v172 = vunpack.c.l.b16 %v131
    %v173 = vpack.c.b16 %v170, %v169
    %v174 = vpack.c.b16 %v172, %v171
    %v178 = vsel %vm148, %v125, 0
    %180 = vmatpush.bf16.msra.mxu0 0
    %181 = vmatpush.bf16.msra.mxu0 0
    %182 = vmatpush.bf16.msra.mxu0 0
    %183 = vmatpush.bf16.msra.mxu0 0
    %184 = vmatpush.bf16.msra.mxu0 0
    %185 = vmatpush.bf16.msra.mxu0 0
    %186 = vmatpush.bf16.msra.mxu0 %v174
    %187 = vmatpush.bf16.msra.mxu0 %v173
    %188 = vmatmul.bf16.gmra.mxu0 %v178
    %v189 = vpop.f32.mrf.mxu0
    %v190 = vadd.f32 %v162, %v189
    %v191 = vpop.f32.mrf.mxu0
    %192 = vdwg.mxu0
    %v193 = vld [vmem:[%s4] sm:$0x1]
    %v195 = vperm.slane %v193, 0
    %v197 = vadd.f32 %v190, %v195
    %v198 = vmax.f32 %v197, 0.0
    %v199 = vpack.c.bf16 %v198, %v198
    %v200 = vld [vmem:[#allocation10] sm:$0xf]
    %v201 = vld [vmem:[#allocation10 + $0x4] sm:$0xf]
    %v202 = vld [vmem:[#allocation10 + $0x8] sm:$0xf]
    %v203 = vld [vmem:[#allocation10 + $0xc] sm:$0xf]
    %v204 = vld [vmem:[%s6] sm:$0x1]
    %v206 = vperm.slane %v204, 0
    %v212 = vunpack.c.l.b16 %v200
    %v213 = vunpack.c.l.b16 %v201
    %v214 = vunpack.c.l.b16 %v202
    %v215 = vunpack.c.l.b16 %v203
    %v216 = vpack.c.b16 %v213, %v212
    %v217 = vpack.c.b16 %v215, %v214
    %v221 = vsel %vm148, %v199, 0
    %223 = vmatpush.bf16.msra.mxu0 0
    %224 = vmatpush.bf16.msra.mxu0 0
    %225 = vmatpush.bf16.msra.mxu0 0
    %226 = vmatpush.bf16.msra.mxu0 0
    %227 = vmatpush.bf16.msra.mxu0 0
    %228 = vmatpush.bf16.msra.mxu0 0
    %229 = vmatpush.bf16.msra.mxu0 %v217
    %230 = vmatpush.bf16.msra.mxu0 %v216
    %231 = vmatmul.bf16.gmra.mxu0 %v221
    %v232 = vpop.f32.mrf.mxu0
    %v233 = vadd.f32 %v206, %v232
    %v234 = vpop.f32.mrf.mxu0
    %235 = vdwg.mxu0
    %v236 = vmax.f32 %v233, 0.0
    %v237 = vpack.c.bf16 %v236, %v236
    %v238 = vld [vmem:[#allocation11] sm:$0xf]
    %v239 = vld [vmem:[#allocation11 + $0x4] sm:$0xf]
    %v240 = vld [vmem:[#allocation11 + $0x8] sm:$0xf]
    %v241 = vld [vmem:[#allocation11 + $0xc] sm:$0xf]
    %v242 = vld [vmem:[%s8] sm:$0x1]
    %v244 = vperm.slane %v242, 0
    %v250 = vunpack.c.l.b16 %v238
    %v251 = vunpack.c.l.b16 %v239
    %v252 = vunpack.c.l.b16 %v240
    %v253 = vunpack.c.l.b16 %v241
    %v254 = vpack.c.b16 %v251, %v250
    %v255 = vpack.c.b16 %v253, %v252
    %v259 = vsel %vm148, %v237, 0
    %261 = vmatpush.bf16.msra.mxu0 0
    %262 = vmatpush.bf16.msra.mxu0 0
    %263 = vmatpush.bf16.msra.mxu0 0
    %264 = vmatpush.bf16.msra.mxu0 0
    %265 = vmatpush.bf16.msra.mxu0 0
    %266 = vmatpush.bf16.msra.mxu0 0
    %267 = vmatpush.bf16.msra.mxu0 %v255
    %268 = vmatpush.bf16.msra.mxu0 %v254
    %269 = vmatmul.bf16.gmra.mxu0 %v259
    %v270 = vpop.f32.mrf.mxu0
    %v271 = vadd.f32 %v244, %v270
    %v272 = vpop.f32.mrf.mxu0
    %273 = vdwg.mxu0
    %v274 = vtanh.pop %v271
    %v275 = vpack.c.bf16 %v274, %v274
    %276 = vst [vmem:[#allocation13] sm:$0xf] %v275
    // Predicated region
    $region62: #{tpu_custom_call.1} parent=1 // pred_check
      _
    $region63: #{tpu_custom_call.1} parent=1 // pred_check_branch
      %278 = sbr.rel (0) target = $region65
    $region64: #{tpu_custom_call.1} parent=1 // pred_region
      %280 = vsyncadd [#allocation4], 0
      %s282 = sshll.u32 [#allocation13], 4
      %s283 = int_to_ptr.vmem [resolvable:$true] %s282
      %s284 = sshll.u32 %s9, 4
      %s285 = int_to_ptr.hbm [resolvable:$true] %s284
      %287 = dma.vmem_to_hbm [thread:$0]  %s283, 64, %s285, [#allocation4]
    $region65: #{tpu_custom_call.1} parent=1 // pred_fallthru
      _
    // Predicated region
    $region66: #{tpu_custom_call.1} parent=1 // pred_check
      _
    $region67: #{tpu_custom_call.1} parent=1 // pred_check_branch
      %289 = sbr.rel (0) target = $region69
    $region68: #{tpu_custom_call.1} parent=1 // pred_region
      %291 = dma.done [#allocation4], 64
    $region69: #{tpu_custom_call.1} parent=1 // pred_fallthru
      _
    %292 = vsyncpa [#allocation3], 1
    %293 = vsyncpa [#allocation6], 1
    %294 = vsyncpa [#allocation9], 1
    %295 = vsyncpa [#allocation12], 1
    %296 = vsyncpa [#allocation4], 1

// kernel: tpu_custom_call.1
$region0: #{tpu_custom_call.1}
  #allocation0 [shape = 'u32[]', space=smem, size = 0x4, offset = 0x4, fixed_abs, tag = 'smem constant byte address 0x4 - core index']
  #allocation1 [shape = 'u32[72,128]{1,0:T(1,128)}', space=vmem, size = 0x9000, scoped, tag = 'internal scratch']
  %s0 = inlined_call_operand.hbm [shape: f32[8,32], index: 0, kind: input, shape index: {}]
  %s1 = inlined_call_operand.hbm [shape: f32[8,32], index: 1, kind: input, shape index: {}]
  %s2 = inlined_call_operand.hbm [shape: bf16[32,32], index: 2, kind: input, shape index: {}]
  %s3 = inlined_call_operand.hbm [shape: bf16[32,32], index: 3, kind: input, shape index: {}]
  %s4 = inlined_call_operand.vmem [shape: f32[1,32], index: 4, kind: input, shape index: {}]
  %s5 = inlined_call_operand.hbm [shape: bf16[32,32], index: 5, kind: input, shape index: {}]
  %s6 = inlined_call_operand.vmem [shape: f32[1,32], index: 6, kind: input, shape index: {}]
  %s7 = inlined_call_operand.hbm [shape: bf16[32,128], index: 7, kind: input, shape index: {}]
  %s8 = inlined_call_operand.vmem [shape: f32[1,128], index: 8, kind: input, shape index: {}]
  %s9 = inlined_call_operand.hbm [shape: bf16[8,128], index: 9, kind: output, shape index: {}]
  %s10 = sld [smem:[#allocation0]]
  $region70: #{tpu_custom_call.1} parent=0
    _
  %s12 = ssub.s32 1, %s10
  %s13 = scalar_select 0, %s12, %s10
  $region1: #{tpu_custom_call.1} parent=0
    #allocation2 [shape = 'u8[4096]{0}', space=vmem, size = 0x1000, scoped, tag = 'input window, operand 0, single buffered']
    #allocation3 [shape = 's32[1]{0}', space=sflag, size = 0x4, scoped, tag = 'scoped memory for tpu_custom_call.1']
    #allocation4 [shape = 's32[1]{0}', space=sflag, size = 0x4, scoped, tag = 'scoped memory for tpu_custom_call.1']
    #allocation5 [shape = 'u8[4096]{0}', space=vmem, size = 0x1000, scoped, tag = 'input window, operand 1, single buffered']
    #allocation6 [shape = 's32[1]{0}', space=sflag, size = 0x4, scoped, tag = 'scoped memory for tpu_custom_call.1']
    #allocation7 [shape = 'u8[8192]{0}', space=vmem, size = 0x2000, scoped, tag = 'input window, operand 2, single buffered']
    #allocation8 [shape = 'u8[8192]{0}', space=vmem, size = 0x2000, scoped, tag = 'input window, operand 3, single buffered']
    #allocation9 [shape = 's32[1]{0}', space=sflag, size = 0x4, scoped, tag = 'scoped memory for tpu_custom_call.1']
    #allocation10 [shape = 'u8[8192]{0}', space=vmem, size = 0x2000, scoped, tag = 'input window, operand 5, single buffered']
    #allocation11 [shape = 'u8[8192]{0}', space=vmem, size = 0x2000, scoped, tag = 'input window, operand 7, single buffered']
    #allocation12 [shape = 's32[1]{0}', space=sflag, size = 0x4, scoped, tag = 'scoped memory for tpu_custom_call.1']
    #allocation13 [shape = 'u8[2048]{0}', space=vmem, size = 0x800, scoped, tag = 'output window, operand 0, single buffered']
    %14 = vsyncpa [#allocation3], 0
    %15 = vsyncpa [#allocation6], 0
    %16 = vsyncpa [#allocation9], 0
    %17 = vsyncpa [#allocation12], 0
    %18 = vsyncpa [#allocation4], 0
    // Predicated region
    $region2: #{tpu_custom_call.1} parent=1 // pred_check
      _
    $region3: #{tpu_custom_call.1} parent=1 // pred_check_branch
      %20 = sbr.rel (0) target = $region5
    $region4: #{tpu_custom_call.1} parent=1 // pred_region
      %22 = vsyncadd [#allocation3], 0
      %s24 = sshll.u32 %s0, 4
      %s25 = int_to_ptr.hbm [resolvable:$true] %s24
      %s26 = sshll.u32 [#allocation2], 4
      %s27 = int_to_ptr.vmem [resolvable:$true] %s26
      %29 = dma.hbm_to_vmem [thread:$0]  %s25, 128, %s27, [#allocation3]
    $region5: #{tpu_custom_call.1} parent=1 // pred_fallthru
      _
    // Predicated region
    $region6: #{tpu_custom_call.1} parent=1 // pred_check
      _
    $region7: #{tpu_custom_call.1} parent=1 // pred_check_branch
      %31 = sbr.rel (0) target = $region9
    $region8: #{tpu_custom_call.1} parent=1 // pred_region
      %33 = vsyncadd [#allocation6], 0
      %s35 = sshll.u32 %s1, 4
      %s36 = int_to_ptr.hbm [resolvable:$true] %s35
      %s37 = sshll.u32 [#allocation5], 4
      %s38 = int_to_ptr.vmem [resolvable:$true] %s37
      %40 = dma.hbm_to_vmem [thread:$0]  %s36, 128, %s38, [#allocation6]
    $region9: #{tpu_custom_call.1} parent=1 // pred_fallthru
      _
    // Predicated region
    $region10: #{tpu_custom_call.1} parent=1 // pred_check
      _
    $region11: #{tpu_custom_call.1} parent=1 // pred_check_branch
      %42 = sbr.rel (0) target = $region13
    $region12: #{tpu_custom_call.1} parent=1 // pred_region
      %44 = vsyncadd [#allocation6], 0
      %s45 = sshll.u32 %s2, 4
      %s46 = int_to_ptr.hbm [resolvable:$true] %s45
      %s47 = sshll.u32 [#allocation7], 4
      %s48 = int_to_ptr.vmem [resolvable:$true] %s47
      %53 = dma.hbm_to_vmem [thread:$0]  %s46, 256, %s48, [#allocation6], 64, 64, 4
    $region13: #{tpu_custom_call.1} parent=1 // pred_fallthru
      _
    // Predicated region
    $region14: #{tpu_custom_call.1} parent=1 // pred_check
      _
    $region15: #{tpu_custom_call.1} parent=1 // pred_check_branch
      %55 = sbr.rel (0) target = $region17
    $region16: #{tpu_custom_call.1} parent=1 // pred_region
      %57 = vsyncadd [#allocation9], 0
      %s58 = sshll.u32 %s3, 4
      %s59 = int_to_ptr.hbm [resolvable:$true] %s58
      %s60 = sshll.u32 [#allocation8], 4
      %s61 = int_to_ptr.vmem [resolvable:$true] %s60
      %66 = dma.hbm_to_vmem [thread:$0]  %s59, 256, %s61, [#allocation9], 64, 64, 4
    $region17: #{tpu_custom_call.1} parent=1 // pred_fallthru
      _
    // Predicated region
    $region18: #{tpu_custom_call.1} parent=1 // pred_check
      _
    $region19: #{tpu_custom_call.1} parent=1 // pred_check_branch
      %68 = sbr.rel (0) target = $region21
    $region20: #{tpu_custom_call.1} parent=1 // pred_region
      _
    $region21: #{tpu_custom_call.1} parent=1 // pred_fallthru
      _
    // Predicated region
    $region22: #{tpu_custom_call.1} parent=1 // pred_check
      _
    $region23: #{tpu_custom_call.1} parent=1 // pred_check_branch
      %70 = sbr.rel (0) target = $region25
    $region24: #{tpu_custom_call.1} parent=1 // pred_region
      %72 = vsyncadd [#allocation9], 0
      %s73 = sshll.u32 %s5, 4
      %s74 = int_to_ptr.hbm [resolvable:$true] %s73
      %s75 = sshll.u32 [#allocation10], 4
      %s76 = int_to_ptr.vmem [resolvable:$true] %s75
      %81 = dma.hbm_to_vmem [thread:$0]  %s74, 256, %s76, [#allocation9], 64, 64, 4
    $region25: #{tpu_custom_call.1} parent=1 // pred_fallthru
      _
    // Predicated region
    $region26: #{tpu_custom_call.1} parent=1 // pred_check
      _
    $region27: #{tpu_custom_call.1} parent=1 // pred_check_branch
      %83 = sbr.rel (0) target = $region29
    $region28: #{tpu_custom_call.1} parent=1 // pred_region
      _
    $region29: #{tpu_custom_call.1} parent=1 // pred_fallthru
      _
    // Predicated region
    $region30: #{tpu_custom_call.1} parent=1 // pred_check
      _
    $region31: #{tpu_custom_call.1} parent=1 // pred_check_branch
      %85 = sbr.rel (0) target = $region33
    $region32: #{tpu_custom_call.1} parent=1 // pred_region
      %87 = vsyncadd [#allocation12], 0
      %s88 = sshll.u32 %s7, 4
      %s89 = int_to_ptr.hbm [resolvable:$true] %s88
      %s90 = sshll.u32 [#allocation11], 4
      %s91 = int_to_ptr.vmem [resolvable:$true] %s90
      %96 = dma.hbm_to_vmem [thread:$0]  %s89, 256, %s91, [#allocation12], 64, 64, 4
    $region33: #{tpu_custom_call.1} parent=1 // pred_fallthru
      _
    // Predicated region
    $region34: #{tpu_custom_call.1} parent=1 // pred_check
      _
    $region35: #{tpu_custom_call.1} parent=1 // pred_check_branch
      %98 = sbr.rel (0) target = $region37
    $region36: #{tpu_custom_call.1} parent=1 // pred_region
      _
    $region37: #{tpu_custom_call.1} parent=1 // pred_fallthru
      _
    // Predicated region
    $region38: #{tpu_custom_call.1} parent=1 // pred_check
      _
    $region39: #{tpu_custom_call.1} parent=1 // pred_check_branch
      %100 = sbr.rel (0) target = $region41
    $region40: #{tpu_custom_call.1} parent=1 // pred_region
      %102 = dma.done [#allocation3], 128
    $region41: #{tpu_custom_call.1} parent=1 // pred_fallthru
      _
    // Predicated region
    $region42: #{tpu_custom_call.1} parent=1 // pred_check
      _
    $region43: #{tpu_custom_call.1} parent=1 // pred_check_branch
      %104 = sbr.rel (0) target = $region45
    $region44: #{tpu_custom_call.1} parent=1 // pred_region
      %106 = dma.done [#allocation6], 128
    $region45: #{tpu_custom_call.1} parent=1 // pred_fallthru
      _
    // Predicated region
    $region46: #{tpu_custom_call.1} parent=1 // pred_check
      _
    $region47: #{tpu_custom_call.1} parent=1 // pred_check_branch
      %108 = sbr.rel (0) target = $region49
    $region48: #{tpu_custom_call.1} parent=1 // pred_region
      %110 = dma.done [#allocation6], 256
    $region49: #{tpu_custom_call.1} parent=1 // pred_fallthru
      _
    // Predicated region
    $region50: #{tpu_custom_call.1} parent=1 // pred_check
      _
    $region51: #{tpu_custom_call.1} parent=1 // pred_check_branch
      %112 = sbr.rel (0) target = $region53
    $region52: #{tpu_custom_call.1} parent=1 // pred_region
      %114 = dma.done [#allocation9], 256
    $region53: #{tpu_custom_call.1} parent=1 // pred_fallthru
      _
    // Predicated region
    $region54: #{tpu_custom_call.1} parent=1 // pred_check
      _
    $region55: #{tpu_custom_call.1} parent=1 // pred_check_branch
      %116 = sbr.rel (0) target = $region57
    $region56: #{tpu_custom_call.1} parent=1 // pred_region
      %118 = dma.done [#allocation9], 256
    $region57: #{tpu_custom_call.1} parent=1 // pred_fallthru
      _
    // Predicated region
    $region58: #{tpu_custom_call.1} parent=1 // pred_check
      _
    $region59: #{tpu_custom_call.1} parent=1 // pred_check_branch
      %120 = sbr.rel (0) target = $region61
    $region60: #{tpu_custom_call.1} parent=1 // pred_region
      %122 = dma.done [#allocation12], 256
    $region61: #{tpu_custom_call.1} parent=1 // pred_fallthru
      _
    %v124 = vld [vmem:[#allocation2] sm:$0xff]
    %v125 = vpack.c.bf16 %v124, %v124
    %v126 = vld [vmem:[#allocation5] sm:$0xff]
    %v127 = vpack.c.bf16 %v126, %v126
    %v128 = vld [vmem:[#allocation7] sm:$0xf]
    %v129 = vld [vmem:[#allocation7 + $0x4] sm:$0xf]
    %v130 = vld [vmem:[#allocation7 + $0x8] sm:$0xf]
    %v131 = vld [vmem:[#allocation7 + $0xc] sm:$0xf]
    %v132 = vld [vmem:[#allocation8] sm:$0xf]
    %v133 = vld [vmem:[#allocation8 + $0x4] sm:$0xf]
    %v134 = vld [vmem:[#allocation8 + $0x8] sm:$0xf]
    %v135 = vld [vmem:[#allocation8 + $0xc] sm:$0xf]
    %v140 = vunpack.c.l.b16 %v132
    %v141 = vunpack.c.l.b16 %v133
    %v142 = vunpack.c.l.b16 %v134
    %v143 = vunpack.c.l.b16 %v135
    %v144 = vpack.c.b16 %v141, %v140
    %v145 = vpack.c.b16 %v143, %v142
    %vm148 = vcmask 261120
    %v150 = vsel %vm148, %v127, 0
    %152 = vmatpush.bf16.msra.mxu0 0
    %153 = vmatpush.bf16.msra.mxu0 0
    %154 = vmatpush.bf16.msra.mxu0 0
    %155 = vmatpush.bf16.msra.mxu0 0
    %156 = vmatpush.bf16.msra.mxu0 0
    %157 = vmatpush.bf16.msra.mxu0 0
    %158 = vmatpush.bf16.msra.mxu0 %v145
    %159 = vmatpush.bf16.msra.mxu0 %v144
    %160 = vmatmul.bf16.gmra.mxu0 %v150
    %v161 = vpop.f32.mrf.mxu0
    %v162 = vadd.f32 0.0, %v161
    %v163 = vpop.f32.mrf.mxu0
    %164 = vdwg.mxu0
    %v169 = vunpack.c.l.b16 %v128
    %v170 = vunpack.c.l.b16 %v129
    %v171 = vunpack.c.l.b16 %v130
    %v172 = vunpack.c.l.b16 %v131
    %v173 = vpack.c.b16 %v170, %v169
    %v174 = vpack.c.b16 %v172, %v171
    %v178 = vsel %vm148, %v125, 0
    %180 = vmatpush.bf16.msra.mxu0 0
    %181 = vmatpush.bf16.msra.mxu0 0
    %182 = vmatpush.bf16.msra.mxu0 0
    %183 = vmatpush.bf16.msra.mxu0 0
    %184 = vmatpush.bf16.msra.mxu0 0
    %185 = vmatpush.bf16.msra.mxu0 0
    %186 = vmatpush.bf16.msra.mxu0 %v174
    %187 = vmatpush.bf16.msra.mxu0 %v173
    %188 = vmatmul.bf16.gmra.mxu0 %v178
    %v189 = vpop.f32.mrf.mxu0
    %v190 = vadd.f32 %v162, %v189
    %v191 = vpop.f32.mrf.mxu0
    %192 = vdwg.mxu0
    %v193 = vld [vmem:[%s4] sm:$0x1]
    %v195 = vperm.slane %v193, 0
    %v197 = vadd.f32 %v190, %v195
    %v198 = vmax.f32 %v197, 0.0
    %v199 = vpack.c.bf16 %v198, %v198
    %v200 = vld [vmem:[#allocation10] sm:$0xf]
    %v201 = vld [vmem:[#allocation10 + $0x4] sm:$0xf]
    %v202 = vld [vmem:[#allocation10 + $0x8] sm:$0xf]
    %v203 = vld [vmem:[#allocation10 + $0xc] sm:$0xf]
    %v204 = vld [vmem:[%s6] sm:$0x1]
    %v206 = vperm.slane %v204, 0
    %v212 = vunpack.c.l.b16 %v200
    %v213 = vunpack.c.l.b16 %v201
    %v214 = vunpack.c.l.b16 %v202
    %v215 = vunpack.c.l.b16 %v203
    %v216 = vpack.c.b16 %v213, %v212
    %v217 = vpack.c.b16 %v215, %v214
    %v221 = vsel %vm148, %v199, 0
    %223 = vmatpush.bf16.msra.mxu0 0
    %224 = vmatpush.bf16.msra.mxu0 0
    %225 = vmatpush.bf16.msra.mxu0 0
    %226 = vmatpush.bf16.msra.mxu0 0
    %227 = vmatpush.bf16.msra.mxu0 0
    %228 = vmatpush.bf16.msra.mxu0 0
    %229 = vmatpush.bf16.msra.mxu0 %v217
    %230 = vmatpush.bf16.msra.mxu0 %v216
    %231 = vmatmul.bf16.gmra.mxu0 %v221
    %v232 = vpop.f32.mrf.mxu0
    %v233 = vadd.f32 %v206, %v232
    %v234 = vpop.f32.mrf.mxu0
    %235 = vdwg.mxu0
    %v236 = vmax.f32 %v233, 0.0
    %v237 = vpack.c.bf16 %v236, %v236
    %v238 = vld [vmem:[#allocation11] sm:$0xf]
    %v239 = vld [vmem:[#allocation11 + $0x4] sm:$0xf]
    %v240 = vld [vmem:[#allocation11 + $0x8] sm:$0xf]
    %v241 = vld [vmem:[#allocation11 + $0xc] sm:$0xf]
    %v242 = vld [vmem:[%s8] sm:$0x1]
    %v244 = vperm.slane %v242, 0
    %v250 = vunpack.c.l.b16 %v238
    %v251 = vunpack.c.l.b16 %v239
    %v252 = vunpack.c.l.b16 %v240
    %v253 = vunpack.c.l.b16 %v241
    %v254 = vpack.c.b16 %v251, %v250
    %v255 = vpack.c.b16 %v253, %v252
    %v259 = vsel %vm148, %v237, 0
    %261 = vmatpush.bf16.msra.mxu0 0
    %262 = vmatpush.bf16.msra.mxu0 0
    %263 = vmatpush.bf16.msra.mxu0 0
    %264 = vmatpush.bf16.msra.mxu0 0
    %265 = vmatpush.bf16.msra.mxu0 0
    %266 = vmatpush.bf16.msra.mxu0 0
    %267 = vmatpush.bf16.msra.mxu0 %v255
    %268 = vmatpush.bf16.msra.mxu0 %v254
    %269 = vmatmul.bf16.gmra.mxu0 %v259
    %v270 = vpop.f32.mrf.mxu0
    %v271 = vadd.f32 %v244, %v270
    %v272 = vpop.f32.mrf.mxu0
    %273 = vdwg.mxu0
    %v274 = vtanh.pop %v271
    %v275 = vpack.c.bf16 %v274, %v274
    %276 = vst [vmem:[#allocation13] sm:$0xf] %v275
    // Predicated region
    $region62: #{tpu_custom_call.1} parent=1 // pred_check
      _
    $region63: #{tpu_custom_call.1} parent=1 // pred_check_branch
      %278 = sbr.rel (0) target = $region65
    $region64: #{tpu_custom_call.1} parent=1 // pred_region
      %280 = vsyncadd [#allocation4], 0
      %s282 = sshll.u32 [#allocation13], 4
      %s283 = int_to_ptr.vmem [resolvable:$true] %s282
      %s284 = sshll.u32 %s9, 4
      %s285 = int_to_ptr.hbm [resolvable:$true] %s284
      %287 = dma.vmem_to_hbm [thread:$0]  %s283, 64, %s285, [#allocation4]
    $region65: #{tpu_custom_call.1} parent=1 // pred_fallthru
      _
    // Predicated region
    $region66: #{tpu_custom_call.1} parent=1 // pred_check
      _
    $region67: #{tpu_custom_call.1} parent=1 // pred_check_branch
      %289 = sbr.rel (0) target = $region69
    $region68: #{tpu_custom_call.1} parent=1 // pred_region
      %291 = dma.done [#allocation4], 64
    $region69: #{tpu_custom_call.1} parent=1 // pred_fallthru
      _
    %292 = vsyncpa [#allocation3], 1
    %293 = vsyncpa [#allocation6], 1
    %294 = vsyncpa [#allocation9], 1
    %295 = vsyncpa [#allocation12], 1
    %296 = vsyncpa [#allocation4], 1

</llo_original>
